<compile_context>
chip_gen: v5e
topology: v5e:2x2
jax: 0.10.0
libtpu: 0.0.40
codegen_flags: <defaults>
</compile_context>

<pallas_src>
import functools

import jax
import jax.numpy as jnp
from jax import lax
from jax.experimental import pallas as pl
from jax.experimental.pallas import tpu as pltpu


_LANES = 128
_SUBLANES = 8
# Budget for the double-buffered input tiles (2 operands x 2 buffers each).
# ~12 MiB keeps the tile set comfortably inside v5e's 16 MiB scoped default
# and v7x's 64 MiB/TC physical VMEM.
_INPUT_VMEM_BUDGET = 12 * 1024 * 1024
_VMEM_LIMIT_BYTES = 32 * 1024 * 1024


def _sigmoid(x):
    # Explicit exp-based sigmoid: exp goes to the EUP, divide to the VPU.
    return 1.0 / (1.0 + jnp.exp(-x))


def _score_kernel_packed(sel_ref, u_ref, i_ref, o_ref):
    """Score one tile with `pack` embedding rows packed per 128-lane vreg row.

    sel_ref      : (pd, pack) bf16 0/1 segment-sum matrix (constant, DMA'd once).
    u_ref, i_ref : (tb, pd)   VMEM tiles in the table's native dtype.
    o_ref        : (tb, pack) sigmoid(dot) scores, one per original row.
    """
    u = u_ref[...].astype(jnp.float32)          # cast after DMA (bf16-friendly)
    v = i_ref[...].astype(jnp.float32)
    prod = u * v                                # VPU, full lane occupancy

    # 2-pass hi/lo bf16 decomposition of the f32 product.  sel is exactly
    # representable in bf16, so this matches an f32 matmul to ~2^-17 relative
    # while issuing only 2 MXU passes (HIGHEST would issue 6).
    hi = prod.astype(jnp.bfloat16)
    lo = (prod - hi.astype(jnp.float32)).astype(jnp.bfloat16)
    sel = sel_ref[...]
    s = jnp.dot(hi, sel, preferred_element_type=jnp.float32)
    s = s + jnp.dot(lo, sel, preferred_element_type=jnp.float32)   # (tb, pack)

    o_ref[...] = _sigmoid(s)


def _score_kernel_rowsum(u_ref, i_ref, o_ref):
    """pack == 1 path: per-row dot via an XLU lane reduction (no MXU)."""
    u = u_ref[...].astype(jnp.float32)
    v = i_ref[...].astype(jnp.float32)
    s = jnp.sum(u * v, axis=-1, keepdims=True)          # (tb, 1), f32
    o_ref[...] = _sigmoid(s)


@functools.partial(jax.jit, static_argnames=("block_rows",))
def puremf_forward(user_table, item_table, users, items, block_rows=None):
    """sigmoid(sum(user_emb[users] * item_emb[items], axis=-1)) -> (B,) f32."""
    users = users.astype(jnp.int32)
    items = items.astype(jnp.int32)
    B = users.shape[0]
    D = user_table.shape[1]

    # --- lane-packing geometry -------------------------------------------
    # Pack 128 // D_pad embedding rows per 128-lane vreg row when D <= 64,
    # padding D up to the next power of two if needed (zero columns add 0).
    npow = pl.next_power_of_2(D)
    if npow <= _LANES // 2:
        D_pad, pack = npow, _LANES // npow
    else:
        D_pad, pack = D, 1
    pd = D_pad * pack                       # == 128 whenever pack > 1

    if D_pad != D:
        user_table = jnp.pad(user_table, ((0, 0), (0, D_pad - D)))
        item_table = jnp.pad(item_table, ((0, 0), (0, D_pad - D)))

    in_itemsize = jnp.dtype(user_table.dtype).itemsize

    # --- tile size ----------------------------------------------------------
    unit = _SUBLANES * pack                 # row granularity (sublane dim % 8)
    bytes_per_packed_row = 2 * 2 * pd * in_itemsize    # 2 inputs, double-buffered
    tb_budget = max(_SUBLANES,
                    (_INPUT_VMEM_BUDGET // bytes_per_packed_row)
                    // _SUBLANES * _SUBLANES)
    blk_auto = tb_budget * pack
    if block_rows is not None:              # optional override, clamped to budget
        blk_auto = max(unit, min(blk_auto, (block_rows // unit) * unit))

    n_steps = pl.cdiv(B, blk_auto)
    if n_steps == 1 and B >= 2 * unit:
        n_steps = 2                          # let v7x shard across its 2 TCs
    blk = pl.cdiv(pl.cdiv(B, n_steps), unit) * unit     # even tiles, minimal pad
    Bp = n_steps * blk
    tb = blk // pack

    # Pad only the cheap int32 index vectors (never the gathered embeddings).
    if Bp != B:
        users = jnp.pad(users, (0, Bp - B))
        items = jnp.pad(items, (0, Bp - B))

    # Embedding row gather in XLA glue, then a free row-major repack into
    # lane-dense (Bp//pack, pd) operands; no dtype cast at the boundary.
    ue = jnp.take(user_table, users, axis=0, mode="clip").reshape(Bp // pack, pd)
    ie = jnp.take(item_table, items, axis=0, mode="clip").reshape(Bp // pack, pd)

    compiler_params = pltpu.CompilerParams(
        dimension_semantics=("parallel",),
        vmem_limit_bytes=_VMEM_LIMIT_BYTES,
    )

    if pack > 1:
        # 0/1 segment-sum matrix (lane l belongs to segment l // D_pad), built
        # once in the wrapper and fed as a constant-index input so it is DMA'd
        # a single time and never recomputed inside the grid loop.
        lane = lax.broadcasted_iota(jnp.int32, (pd, pack), 0)
        seg = lax.broadcasted_iota(jnp.int32, (pd, pack), 1)
        sel = ((lane >= seg * D_pad) & (lane < (seg + 1) * D_pad)
               ).astype(jnp.bfloat16)

        out = pl.pallas_call(
            _score_kernel_packed,
            out_shape=jax.ShapeDtypeStruct((Bp // pack, pack), jnp.float32),
            grid=(n_steps,),
            in_specs=[
                pl.BlockSpec((pd, pack), lambda i: (0, 0)),   # constant -> 1 DMA
                pl.BlockSpec((tb, pd), lambda i: (i, 0)),
                pl.BlockSpec((tb, pd), lambda i: (i, 0)),
            ],
            out_specs=pl.BlockSpec((tb, pack), lambda i: (i, 0)),
            compiler_params=compiler_params,
        )(sel, ue, ie)
    else:
        out = pl.pallas_call(
            _score_kernel_rowsum,
            out_shape=jax.ShapeDtypeStruct((Bp, 1), jnp.float32),
            grid=(n_steps,),
            in_specs=[
                pl.BlockSpec((tb, pd), lambda i: (i, 0)),
                pl.BlockSpec((tb, pd), lambda i: (i, 0)),
            ],
            out_specs=pl.BlockSpec((tb, 1), lambda i: (i, 0)),
            compiler_params=compiler_params,
        )(ue, ie)

    # Row-major contiguous in original row order.
    return out.reshape(Bp)[:B]


def _reference_forward(user_table, item_table, users, items):
    ue = jnp.take(user_table, users.astype(jnp.int32), axis=0).astype(jnp.float32)
    ie = jnp.take(item_table, items.astype(jnp.int32), axis=0).astype(jnp.float32)
    return jax.nn.sigmoid(jnp.sum(ue * ie, axis=-1))


def _check(user_table, item_table, users, items):
    got = jax.block_until_ready(puremf_forward(user_table, item_table, users, items))
    ref = _reference_forward(user_table, item_table, users, items)
    assert got.shape == ref.shape
    assert jnp.allclose(got, ref, atol=1e-4, rtol=1e-4), \
        float(jnp.max(jnp.abs(got - ref)))


if __name__ == "__main__":
    # Small deterministic setup consistent with PureMF.__init__:
    #   embedding_user : (num_users, latent_dim), N(0, 1) init
    #   embedding_item : (num_items, latent_dim), N(0, 1) init
    key = jax.random.PRNGKey(0)

    # 1) Main case: latent_dim=32 -> lane-packed path (pack=4).
    num_users, num_items, latent_dim, batch = 32, 64, 32, 8
    k_u, k_i, k_uid, k_iid, key = jax.random.split(key, 5)
    user_table = jax.random.normal(k_u, (num_users, latent_dim), jnp.float32)
    item_table = jax.random.normal(k_i, (num_items, latent_dim), jnp.float32)
    users = jax.random.randint(k_uid, (batch,), 0, num_users, jnp.int32)
    items = jax.random.randint(k_iid, (batch,), 0, num_items, jnp.int32)
    _check(user_table, item_table, users, items)

    # 2) latent_dim=128 -> pack==1 XLU-reduce path, multi-step grid.
    num_users, num_items, latent_dim, batch = 48, 40, 128, 200
    k_u, k_i, k_uid, k_iid, key = jax.random.split(key, 5)
    user_table = jax.random.normal(k_u, (num_users, latent_dim), jnp.float32)
    item_table = jax.random.normal(k_i, (num_items, latent_dim), jnp.float32)
    users = jax.random.randint(k_uid, (batch,), 0, num_users, jnp.int32)
    items = jax.random.randint(k_iid, (batch,), 0, num_items, jnp.int32)
    _check(user_table, item_table, users, items)

    # 3) latent_dim=48 -> D padded to 64, pack=2 path.
    num_users, num_items, latent_dim, batch = 30, 50, 48, 40
    k_u, k_i, k_uid, k_iid, key = jax.random.split(key, 5)
    user_table = jax.random.normal(k_u, (num_users, latent_dim), jnp.float32)
    item_table = jax.random.normal(k_i, (num_items, latent_dim), jnp.float32)
    users = jax.random.randint(k_uid, (batch,), 0, num_users, jnp.int32)
    items = jax.random.randint(k_iid, (batch,), 0, num_items, jnp.int32)
    _check(user_table, item_table, users, items)

    print("KERNEL_OK")
</pallas_src>

<mosaic_0001>
module attributes {stable_mosaic.version = 11 : i64} {
  func.func @_score_kernel_packed(%arg0: i32, %arg1: memref<128x4xbf16, #tpu.memory_space<vmem>>, %arg2: memref<8x128xf32, #tpu.memory_space<vmem>>, %arg3: memref<8x128xf32, #tpu.memory_space<vmem>>, %arg4: memref<8x4xf32, #tpu.memory_space<vmem>>) attributes {dimension_semantics = [#tpu.dimension_semantics<parallel>], iteration_bounds = array<i64: 1>, scalar_prefetch = 0 : i64, scratch_operands = 0 : i64, tpu.core_type = #tpu.core_type<tc>, window_params = [{pipeline_mode = #tpu.pipeline_mode<synchronous>, transform_indices = @transform_0, window_bounds = array<i64: 128, 4>}, {transform_indices = @transform_1, window_bounds = array<i64: 8, 128>}, {transform_indices = @transform_2, window_bounds = array<i64: 8, 128>}, {transform_indices = @transform_3, window_bounds = array<i64: 8, 4>}]} {
    %c0 = arith.constant 0 : index
    %c0_0 = arith.constant 0 : index
    %0 = vector.load %arg2[%c0, %c0_0] : memref<8x128xf32, #tpu.memory_space<vmem>>, vector<8x128xf32>
    %c0_1 = arith.constant 0 : index
    %c0_2 = arith.constant 0 : index
    %1 = vector.load %arg3[%c0_1, %c0_2] : memref<8x128xf32, #tpu.memory_space<vmem>>, vector<8x128xf32>
    %2 = arith.mulf %0, %1 : vector<8x128xf32>
    %3 = arith.truncf %2 : vector<8x128xf32> to vector<8x128xbf16>
    %4 = arith.extf %3 : vector<8x128xbf16> to vector<8x128xf32>
    %5 = arith.subf %2, %4 : vector<8x128xf32>
    %6 = arith.truncf %5 : vector<8x128xf32> to vector<8x128xbf16>
    %c0_3 = arith.constant 0 : index
    %c0_4 = arith.constant 0 : index
    %7 = vector.load %arg1[%c0_3, %c0_4] : memref<128x4xbf16, #tpu.memory_space<vmem>>, vector<128x4xbf16>
    %cst = arith.constant dense<0.000000e+00> : vector<8x4xf32>
    %8 = tpu.matmul %3, %7, %cst {dimension_numbers = #tpu.dot_dimension_numbers<[1], [0], [0], [1], [0, 0, 1, 1], [], []>} : vector<8x128xbf16>, vector<128x4xbf16>, vector<8x4xf32> -> vector<8x4xf32>
    %cst_5 = arith.constant dense<0.000000e+00> : vector<8x4xf32>
    %9 = tpu.matmul %6, %7, %cst_5 {dimension_numbers = #tpu.dot_dimension_numbers<[1], [0], [0], [1], [0, 0, 1, 1], [], []>} : vector<8x128xbf16>, vector<128x4xbf16>, vector<8x4xf32> -> vector<8x4xf32>
    %10 = arith.addf %8, %9 : vector<8x4xf32>
    %cst_6 = arith.constant 0.000000e+00 : f32
    %11 = vector.broadcast %cst_6 : f32 to vector<8x4xf32>
    %12 = arith.subf %11, %10 : vector<8x4xf32>
    %13 = math.exp %12 : vector<8x4xf32>
    %cst_7 = arith.constant 1.000000e+00 : f32
    %14 = vector.broadcast %cst_7 : f32 to vector<8x4xf32>
    %15 = arith.addf %14, %13 : vector<8x4xf32>
    %cst_8 = arith.constant 1.000000e+00 : f32
    %16 = vector.broadcast %cst_8 : f32 to vector<8x4xf32>
    %17 = arith.divf %16, %15 : vector<8x4xf32>
    %c0_9 = arith.constant 0 : index
    %c0_10 = arith.constant 0 : index
    %18 = vector.load %arg4[%c0_9, %c0_10] : memref<8x4xf32, #tpu.memory_space<vmem>>, vector<8x4xf32>
    tpu.vector_store %arg4[%c0_9, %c0_10], %17 {strides = array<i32>} : memref<8x4xf32, #tpu.memory_space<vmem>>, vector<8x4xf32>,
    return
  }
  func.func @transform_0(%arg0: i32) -> (i32, i32) {
    %c0_i32 = arith.constant 0 : i32
    %c0_i32_0 = arith.constant 0 : i32
    %c0_i32_1 = arith.constant 0 : i32
    return %c0_i32, %c0_i32_0 : i32, i32
  }
  func.func @transform_1(%arg0: i32) -> (i32, i32) {
    %c0_i32 = arith.constant 0 : i32
    %c0_i32_0 = arith.constant 0 : i32
    return %arg0, %c0_i32 : i32, i32
  }
  func.func @transform_2(%arg0: i32) -> (i32, i32) {
    %c0_i32 = arith.constant 0 : i32
    %c0_i32_0 = arith.constant 0 : i32
    return %arg0, %c0_i32 : i32, i32
  }
  func.func @transform_3(%arg0: i32) -> (i32, i32) {
    %c0_i32 = arith.constant 0 : i32
    %c0_i32_0 = arith.constant 0 : i32
    return %arg0, %c0_i32 : i32, i32
  }
}

</mosaic_0001>

<llo_original>
// kernel: puremf_forward.1
$region0: #{puremf_forward.1}
  #allocation0 [shape = 'u32[]', space=smem, size = 0x4, offset = 0x4, fixed_abs, tag = 'smem constant byte address 0x4 - core index']
  #allocation1 [shape = 'u32[72,128]{1,0:T(1,128)}', space=vmem, size = 0x9000, scoped, tag = 'internal scratch']
  %s0 = inlined_call_operand.vmem [shape: bf16[128,4], index: 0, kind: input, shape index: {}]
  %s1 = inlined_call_operand.vmem [shape: f32[8,128], index: 1, kind: input, shape index: {}]
  %s2 = inlined_call_operand.vmem [shape: f32[8,128], index: 2, kind: input, shape index: {}]
  %s3 = inlined_call_operand.vmem [shape: f32[8,4], index: 3, kind: output, shape index: {}]
  %s4 = sld [smem:[#allocation0]]
  $region22: #{puremf_forward.1} parent=0
    _
  %s6 = ssub.s32 1, %s4
  %s7 = scalar_select 0, %s6, %s4
  // Predicated region
  $region2: #{puremf_forward.1} parent=0 // pred_check
    _
  $region3: #{puremf_forward.1} parent=0 // pred_check_branch
    %9 = sbr.rel (0) target = $region5
  $region4: #{puremf_forward.1} parent=0 // pred_region
    _
  $region5: #{puremf_forward.1} parent=0 // pred_fallthru
    _
  // Predicated region
  $region6: #{puremf_forward.1} parent=0 // pred_check
    _
  $region7: #{puremf_forward.1} parent=0 // pred_check_branch
    %11 = sbr.rel (0) target = $region9
  $region8: #{puremf_forward.1} parent=0 // pred_region
    _
  $region9: #{puremf_forward.1} parent=0 // pred_fallthru
    _
  // Predicated region
  $region10: #{puremf_forward.1} parent=0 // pred_check
    _
  $region11: #{puremf_forward.1} parent=0 // pred_check_branch
    %13 = sbr.rel (0) target = $region13
  $region12: #{puremf_forward.1} parent=0 // pred_region
    _
  $region13: #{puremf_forward.1} parent=0 // pred_fallthru
    _
  %v14 = vld [vmem:[%s1] sm:$0xff]
  %v15 = vld [vmem:[%s2] sm:$0xff]
  %v16 = vmul.f32 %v14, %v15
  %v17 = vpack.c.bf16 %v16, %v16
  %v18 = vunpack.c.l.bf16 %v17
  %v19 = vsub.f32 %v16, %v18
  %v20 = vpack.c.bf16 %v19, %v19
  %v21 = vld [vmem:[%s0] sm:$0xf]
  %v22 = vld [vmem:[%s0 + $0x4] sm:$0xf]
  %v23 = vld [vmem:[%s0 + $0x8] sm:$0xf]
  %v24 = vld [vmem:[%s0 + $0xc] sm:$0xf]
  %v25 = vld [vmem:[%s0 + $0x10] sm:$0xf]
  %v26 = vld [vmem:[%s0 + $0x14] sm:$0xf]
  %v27 = vld [vmem:[%s0 + $0x18] sm:$0xf]
  %v28 = vld [vmem:[%s0 + $0x1c] sm:$0xf]
  %v29 = vld [vmem:[%s0 + $0x20] sm:$0xf]
  %v30 = vld [vmem:[%s0 + $0x24] sm:$0xf]
  %v31 = vld [vmem:[%s0 + $0x28] sm:$0xf]
  %v32 = vld [vmem:[%s0 + $0x2c] sm:$0xf]
  %v33 = vld [vmem:[%s0 + $0x30] sm:$0xf]
  %v34 = vld [vmem:[%s0 + $0x34] sm:$0xf]
  %v35 = vld [vmem:[%s0 + $0x38] sm:$0xf]
  %v36 = vld [vmem:[%s0 + $0x3c] sm:$0xf]
  %v53 = vunpack.c.l.b16 %v21
  %v54 = vunpack.c.l.b16 %v22
  %v55 = vunpack.c.l.b16 %v23
  %v56 = vunpack.c.l.b16 %v24
  %v57 = vunpack.c.l.b16 %v25
  %v58 = vunpack.c.l.b16 %v26
  %v59 = vunpack.c.l.b16 %v27
  %v60 = vunpack.c.l.b16 %v28
  %v61 = vunpack.c.l.b16 %v29
  %v62 = vunpack.c.l.b16 %v30
  %v63 = vunpack.c.l.b16 %v31
  %v64 = vunpack.c.l.b16 %v32
  %v65 = vunpack.c.l.b16 %v33
  %v66 = vunpack.c.l.b16 %v34
  %v67 = vunpack.c.l.b16 %v35
  %v68 = vunpack.c.l.b16 %v36
  %v69 = vpack.c.b16 %v54, %v53
  %v70 = vpack.c.b16 %v56, %v55
  %v71 = vpack.c.b16 %v58, %v57
  %v72 = vpack.c.b16 %v60, %v59
  %v73 = vpack.c.b16 %v62, %v61
  %v74 = vpack.c.b16 %v64, %v63
  %v75 = vpack.c.b16 %v66, %v65
  %v76 = vpack.c.b16 %v68, %v67
  %85 = vmatpush.bf16.msra.mxu0 %v76
  %86 = vmatpush.bf16.msra.mxu0 %v75
  %87 = vmatpush.bf16.msra.mxu0 %v74
  %88 = vmatpush.bf16.msra.mxu0 %v73
  %89 = vmatpush.bf16.msra.mxu0 %v72
  %90 = vmatpush.bf16.msra.mxu0 %v71
  %91 = vmatpush.bf16.msra.mxu0 %v70
  %92 = vmatpush.bf16.msra.mxu0 %v69
  %93 = vmatmul.bf16.gmra.mxu0 %v20
  %v94 = vpop.f32.mrf.mxu0
  %v95 = vadd.f32 0.0, %v94
  %v96 = vpop.f32.mrf.mxu0
  %97 = vdwg.mxu0
  %98 = vmatpush.bf16.msra.mxu0 %v76
  %99 = vmatpush.bf16.msra.mxu0 %v75
  %100 = vmatpush.bf16.msra.mxu0 %v74
  %101 = vmatpush.bf16.msra.mxu0 %v73
  %102 = vmatpush.bf16.msra.mxu0 %v72
  %103 = vmatpush.bf16.msra.mxu0 %v71
  %104 = vmatpush.bf16.msra.mxu0 %v70
  %105 = vmatpush.bf16.msra.mxu0 %v69
  %106 = vmatmul.bf16.gmra.mxu0 %v17
  %v107 = vpop.f32.mrf.mxu0
  %v108 = vadd.f32 %v95, %v107
  %v109 = vpop.f32.mrf.mxu0
  %110 = vdwg.mxu0
  %v111 = vsub.f32 0.0, %v108
  %v112 = vmul.f32 %v111, 1.442695
  %v113 = vpow.pop %v112
  %v114 = vadd.f32 %v113, 1.0
  %v115 = vrcp.pop %v114
  %v116 = vmul.f32 %v114, %v115
  %v117 = vsub.f32 1.0, %v116
  %v118 = vmul.f32 %v115, %v117
  %v119 = vadd.f32 %v115, %v118
  %vm120 = vweird.f32 %v114
  %vm121 = vweird.f32 %v115
  %vm122 = vmor %vm120, %vm121
  %v123 = vsel %vm122, %v115, %v119
  %v124 = vand.u32 2147483647, %v114
  %vm125 = vcmp.eq.f32.partialorder %v124, 8.507059e+37
  %v126 = vand.u32 %v114, 2147483648
  %v127 = vor.u32 1.1754944e-38, %v126
  %v128 = vsel %vm125, %v127, %v123
  %v129 = vmul.f32 1.0, %v128
  %vm130 = vcmask 31744
  %131 = vst.msk [vmem:[%s3] sm:$0xff] %vm130, %v129
  // Predicated region
  $region14: #{puremf_forward.1} parent=0 // pred_check
    _
  $region15: #{puremf_forward.1} parent=0 // pred_check_branch
    %133 = sbr.rel (0) target = $region17
  $region16: #{puremf_forward.1} parent=0 // pred_region
    _
  $region17: #{puremf_forward.1} parent=0 // pred_fallthru
    _
  // Predicated region
  $region18: #{puremf_forward.1} parent=0 // pred_check
    _
  $region19: #{puremf_forward.1} parent=0 // pred_check_branch
    %135 = sbr.rel (0) target = $region21
  $region20: #{puremf_forward.1} parent=0 // pred_region
    _
  $region21: #{puremf_forward.1} parent=0 // pred_fallthru
    _

</llo_original>
